<compile_context>
chip_gen: v6e
topology: v6e:2x2x1
jax: 0.10.0
libtpu: 0.0.40
codegen_flags: <defaults>
</compile_context>

<pallas_src>
import jax
import jax.numpy as jnp
from jax.experimental import pallas as pl
from jax.experimental.pallas import tpu as pltpu

RF_DIM = 10 * 4
CF_DIM = 4
STATE_DIM = RF_DIM + CF_DIM      # 44
ACTION_DIM = 1
HIDDEN = 64
N_PACK = 6                       # [w1a, b1, b2, b3, w4_col, b4]


def mlp_kernel(state_ref, action_ref, w1_ref, w2_ref, w3_ref, pk_ref, o_ref):
    """Feature-major MLP: activations are (HIDDEN, tb), batch along lanes."""
    state = state_ref[...]                    # (tb, 44)  row-major input
    action = action_ref[...]                  # (1, tb)   lane-dense
    pk = pk_ref[...]                          # (64, 6)   packed small params
    w1a = pk[:, 0:1]                          # (64, 1)   fc1 action column
    b1 = pk[:, 1:2]
    b2 = pk[:, 2:3]
    b3 = pk[:, 3:4]
    w4 = pk[:, 4:5]                           # (64, 1)   fc4 weight column
    b4 = pk[0:1, 5:6]                         # (1, 1)

    # fc1: (64,44) contracted with (tb,44) on their last dims -> (64, tb).
    # The concat with the width-1 action is fused as a rank-1 broadcast term
    # (pure VPU work), so no (B,45) intermediate ever touches HBM.
    h = jax.lax.dot_general(w1_ref[...], state,
                            (((1,), (1,)), ((), ())),
                            preferred_element_type=jnp.float32)
    h = jnp.maximum(h + w1a * action + b1, 0.0)

    # fc2 / fc3: (64,64) x (64,tb) on the MXU with f32 accumulation;
    # PyTorch (out,in) weights are used directly (h_new^T = W @ h^T).
    h = jnp.maximum(
        jnp.dot(w2_ref[...], h, preferred_element_type=jnp.float32) + b2, 0.0)
    h = jnp.maximum(
        jnp.dot(w3_ref[...], h, preferred_element_type=jnp.float32) + b3, 0.0)

    # fc4 (output width 1): VPU multiply + sublane reduction -> (1, tb),
    # already lane-dense, so the writeback is an unmasked contiguous store.
    out = jnp.sum(h * w4, axis=0, keepdims=True) + b4
    o_ref[...] = out.astype(o_ref.dtype)


def _round_up(x, m):
    return (x + m - 1) // m * m


def model_forward(state, action, params, block_b=4096):
    """state: (B, 44) f32, action: (B, 1) f32 -> (B, 1) f32."""
    w1sT, w2T, w3T, pack = params
    B = state.shape[0]
    block_b = _round_up(max(block_b, 128), 128)

    # Adaptive batch tile: large enough to amortize per-grid-step overhead,
    # chosen from the number of blocks so padding waste stays bounded.
    n_blocks = -(-B // block_b)
    tb = _round_up(-(-B // n_blocks), 128)
    Bp = tb * n_blocks

    action_row = action.reshape(1, B)          # lane-dense presentation (free)
    if Bp != B:
        state = jnp.pad(state, ((0, Bp - B), (0, 0)))
        action_row = jnp.pad(action_row, ((0, 0), (0, Bp - B)))

    def resident(rows, cols):
        # Constant index_map -> block stays VMEM-resident across grid steps.
        return pl.BlockSpec((rows, cols), lambda i: (0, 0))

    out = pl.pallas_call(
        mlp_kernel,
        out_shape=jax.ShapeDtypeStruct((1, Bp), jnp.float32),
        grid=(Bp // tb,),
        in_specs=[
            pl.BlockSpec((tb, STATE_DIM), lambda i: (i, 0)),   # state rows
            pl.BlockSpec((1, tb), lambda i: (0, i)),           # action (lane-dense)
            resident(HIDDEN, STATE_DIM),                       # fc1 weight (64,44)
            resident(HIDDEN, HIDDEN),                          # fc2 weight (64,64)
            resident(HIDDEN, HIDDEN),                          # fc3 weight (64,64)
            resident(HIDDEN, N_PACK),                          # packed small params
        ],
        out_specs=pl.BlockSpec((1, tb), lambda i: (0, i)),     # lane-dense output
        compiler_params=pltpu.CompilerParams(
            dimension_semantics=("parallel",),
            vmem_limit_bytes=32 * 1024 * 1024),
    )(state, action_row, w1sT, w2T, w3T, pack)

    return out.reshape(Bp, 1)[:B]


def init_params(key):
    """Deterministic init matching nn.Linear shapes (PyTorch (out,in) layout).

    fc1 is split into its state columns (64,44) and action column; the tiny
    params (w1a, b1, b2, b3, fc4 row, b4) are packed into one (64,6) array.
    """
    dims = [(STATE_DIM + ACTION_DIM, HIDDEN), (HIDDEN, HIDDEN),
            (HIDDEN, HIDDEN), (HIDDEN, 1)]
    raw = []
    for i, (fan_in, fan_out) in enumerate(dims):
        kw, kb, key = jax.random.split(jax.random.fold_in(key, i), 3)
        bound = 1.0 / jnp.sqrt(fan_in)
        w = jax.random.uniform(kw, (fan_out, fan_in), jnp.float32, -bound, bound)
        b = jax.random.uniform(kb, (fan_out,), jnp.float32, -bound, bound)
        raw += [w, b]
    w1, b1, w2, b2, w3, b3, w4, b4 = raw
    w1sT = w1[:, :STATE_DIM]                          # (64, 44)
    w1a = w1[:, STATE_DIM:]                           # (64, 1)
    pack = jnp.concatenate(
        [w1a, b1[:, None], b2[:, None], b3[:, None], w4.T,
         jnp.full((HIDDEN, 1), b4[0], jnp.float32)], axis=1)   # (64, 6)
    return (w1sT, w2, w3, pack)


def reference_forward(state, action, params):
    w1sT, w2T, w3T, pack = params
    w1a, b1, b2, b3, w4c = [pack[:, i:i + 1] for i in range(5)]
    b4 = pack[0, 5]
    h = jax.nn.relu(state @ w1sT.T + action @ w1a.T + b1.T)
    h = jax.nn.relu(h @ w2T.T + b2.T)
    h = jax.nn.relu(h @ w3T.T + b3.T)
    return h @ w4c + b4


if __name__ == "__main__":
    key = jax.random.PRNGKey(0)
    k_state, k_action, k_params = jax.random.split(key, 3)
    params = init_params(k_params)

    # Small batch at the module's exact dims: state (B, 44), action (B, 1).
    B = 8
    state = jax.random.normal(k_state, (B, STATE_DIM), jnp.float32)
    action = jax.random.normal(k_action, (B, ACTION_DIM), jnp.float32)
    out = jax.block_until_ready(model_forward(state, action, params))
    ref = reference_forward(state, action, params)
    assert out.shape == (B, 1)
    assert jnp.allclose(out, ref, atol=1e-4, rtol=1e-5)

    # Exercise the multi-block grid + batch-padding path.
    B2 = 300
    k2s, k2a = jax.random.split(jax.random.fold_in(key, 7))
    state2 = jax.random.normal(k2s, (B2, STATE_DIM), jnp.float32)
    action2 = jax.random.normal(k2a, (B2, ACTION_DIM), jnp.float32)
    out2 = jax.block_until_ready(model_forward(state2, action2, params, block_b=128))
    ref2 = reference_forward(state2, action2, params)
    assert out2.shape == (B2, 1)
    assert jnp.allclose(out2, ref2, atol=1e-4, rtol=1e-5)

    print("KERNEL_OK")
</pallas_src>

<mosaic_0001>
module attributes {stable_mosaic.version = 11 : i64} {
  func.func @mlp_kernel(%arg0: i32, %arg1: memref<128x44xf32, #tpu.memory_space<vmem>>, %arg2: memref<1x128xf32, #tpu.memory_space<vmem>>, %arg3: memref<64x44xf32, #tpu.memory_space<vmem>>, %arg4: memref<64x64xf32, #tpu.memory_space<vmem>>, %arg5: memref<64x64xf32, #tpu.memory_space<vmem>>, %arg6: memref<64x6xf32, #tpu.memory_space<vmem>>, %arg7: memref<1x128xf32, #tpu.memory_space<vmem>>) attributes {dimension_semantics = [#tpu.dimension_semantics<parallel>], iteration_bounds = array<i64: 1>, scalar_prefetch = 0 : i64, scratch_operands = 0 : i64, tpu.core_type = #tpu.core_type<tc>, window_params = [{transform_indices = @transform_0, window_bounds = array<i64: 128, 44>}, {transform_indices = @transform_1, window_bounds = array<i64: 1, 128>}, {pipeline_mode = #tpu.pipeline_mode<synchronous>, transform_indices = @transform_2, window_bounds = array<i64: 64, 44>}, {pipeline_mode = #tpu.pipeline_mode<synchronous>, transform_indices = @transform_3, window_bounds = array<i64: 64, 64>}, {pipeline_mode = #tpu.pipeline_mode<synchronous>, transform_indices = @transform_4, window_bounds = array<i64: 64, 64>}, {pipeline_mode = #tpu.pipeline_mode<synchronous>, transform_indices = @transform_5, window_bounds = array<i64: 64, 6>}, {transform_indices = @transform_6, window_bounds = array<i64: 1, 128>}]} {
    %c0 = arith.constant 0 : index
    %c0_0 = arith.constant 0 : index
    %0 = vector.load %arg1[%c0, %c0_0] : memref<128x44xf32, #tpu.memory_space<vmem>>, vector<128x44xf32>
    %c0_1 = arith.constant 0 : index
    %c0_2 = arith.constant 0 : index
    %1 = vector.load %arg2[%c0_1, %c0_2] : memref<1x128xf32, #tpu.memory_space<vmem>>, vector<1x128xf32>
    %c0_3 = arith.constant 0 : index
    %c0_4 = arith.constant 0 : index
    %2 = vector.load %arg6[%c0_3, %c0_4] : memref<64x6xf32, #tpu.memory_space<vmem>>, vector<64x6xf32>
    %3 = vector.extract_strided_slice %2 {offsets = [0, 0], sizes = [64, 1], strides = [1, 1]} : vector<64x6xf32> to vector<64x1xf32>
    %4 = vector.extract_strided_slice %2 {offsets = [0, 1], sizes = [64, 1], strides = [1, 1]} : vector<64x6xf32> to vector<64x1xf32>
    %5 = vector.extract_strided_slice %2 {offsets = [0, 2], sizes = [64, 1], strides = [1, 1]} : vector<64x6xf32> to vector<64x1xf32>
    %6 = vector.extract_strided_slice %2 {offsets = [0, 3], sizes = [64, 1], strides = [1, 1]} : vector<64x6xf32> to vector<64x1xf32>
    %7 = vector.extract_strided_slice %2 {offsets = [0, 4], sizes = [64, 1], strides = [1, 1]} : vector<64x6xf32> to vector<64x1xf32>
    %8 = vector.extract_strided_slice %2 {offsets = [0, 5], sizes = [1, 1], strides = [1, 1]} : vector<64x6xf32> to vector<1x1xf32>
    %c0_5 = arith.constant 0 : index
    %c0_6 = arith.constant 0 : index
    %9 = vector.load %arg3[%c0_5, %c0_6] : memref<64x44xf32, #tpu.memory_space<vmem>>, vector<64x44xf32>
    %cst = arith.constant dense<0.000000e+00> : vector<64x128xf32>
    %10 = tpu.matmul %9, %0, %cst {dimension_numbers = #tpu.dot_dimension_numbers<[1], [1], [0], [0], [0, 0, 1, 0], [], []>} : vector<64x44xf32>, vector<128x44xf32>, vector<64x128xf32> -> vector<64x128xf32>
    %11 = vector.broadcast %3 : vector<64x1xf32> to vector<64x128xf32>
    %12 = vector.broadcast %1 : vector<1x128xf32> to vector<64x128xf32>
    %13 = arith.mulf %11, %12 : vector<64x128xf32>
    %14 = arith.addf %10, %13 : vector<64x128xf32>
    %15 = vector.broadcast %4 : vector<64x1xf32> to vector<64x128xf32>
    %16 = arith.addf %14, %15 : vector<64x128xf32>
    %cst_7 = arith.constant 0.000000e+00 : f32
    %17 = vector.broadcast %cst_7 : f32 to vector<64x128xf32>
    %18 = arith.maximumf %16, %17 : vector<64x128xf32>
    %c0_8 = arith.constant 0 : index
    %c0_9 = arith.constant 0 : index
    %19 = vector.load %arg4[%c0_8, %c0_9] : memref<64x64xf32, #tpu.memory_space<vmem>>, vector<64x64xf32>
    %cst_10 = arith.constant dense<0.000000e+00> : vector<64x128xf32>
    %20 = tpu.matmul %19, %18, %cst_10 {dimension_numbers = #tpu.dot_dimension_numbers<[1], [0], [0], [1], [0, 0, 1, 1], [], []>} : vector<64x64xf32>, vector<64x128xf32>, vector<64x128xf32> -> vector<64x128xf32>
    %21 = vector.broadcast %5 : vector<64x1xf32> to vector<64x128xf32>
    %22 = arith.addf %20, %21 : vector<64x128xf32>
    %cst_11 = arith.constant 0.000000e+00 : f32
    %23 = vector.broadcast %cst_11 : f32 to vector<64x128xf32>
    %24 = arith.maximumf %22, %23 : vector<64x128xf32>
    %c0_12 = arith.constant 0 : index
    %c0_13 = arith.constant 0 : index
    %25 = vector.load %arg5[%c0_12, %c0_13] : memref<64x64xf32, #tpu.memory_space<vmem>>, vector<64x64xf32>
    %cst_14 = arith.constant dense<0.000000e+00> : vector<64x128xf32>
    %26 = tpu.matmul %25, %24, %cst_14 {dimension_numbers = #tpu.dot_dimension_numbers<[1], [0], [0], [1], [0, 0, 1, 1], [], []>} : vector<64x64xf32>, vector<64x128xf32>, vector<64x128xf32> -> vector<64x128xf32>
    %27 = vector.broadcast %6 : vector<64x1xf32> to vector<64x128xf32>
    %28 = arith.addf %26, %27 : vector<64x128xf32>
    %cst_15 = arith.constant 0.000000e+00 : f32
    %29 = vector.broadcast %cst_15 : f32 to vector<64x128xf32>
    %30 = arith.maximumf %28, %29 : vector<64x128xf32>
    %31 = vector.broadcast %7 : vector<64x1xf32> to vector<64x128xf32>
    %32 = arith.mulf %30, %31 : vector<64x128xf32>
    %cst_16 = arith.constant dense<0.000000e+00> : vector<128xf32>
    %33 = vector.multi_reduction <add>, %32, %cst_16 [0] : vector<64x128xf32> to vector<128xf32>
    %34 = vector.shape_cast %33 : vector<128xf32> to vector<1x128xf32>
    %35 = vector.broadcast %8 : vector<1x1xf32> to vector<1x128xf32>
    %36 = arith.addf %34, %35 : vector<1x128xf32>
    %c0_17 = arith.constant 0 : index
    %c0_18 = arith.constant 0 : index
    %37 = vector.load %arg7[%c0_17, %c0_18] : memref<1x128xf32, #tpu.memory_space<vmem>>, vector<1x128xf32>
    tpu.vector_store %arg7[%c0_17, %c0_18], %36 {strides = array<i32>} : memref<1x128xf32, #tpu.memory_space<vmem>>, vector<1x128xf32>,
    return
  }
  func.func @transform_0(%arg0: i32) -> (i32, i32) {
    %c0_i32 = arith.constant 0 : i32
    %c0_i32_0 = arith.constant 0 : i32
    return %arg0, %c0_i32 : i32, i32
  }
  func.func @transform_1(%arg0: i32) -> (i32, i32) {
    %c0_i32 = arith.constant 0 : i32
    %c0_i32_0 = arith.constant 0 : i32
    return %c0_i32, %arg0 : i32, i32
  }
  func.func @transform_2(%arg0: i32) -> (i32, i32) {
    %c0_i32 = arith.constant 0 : i32
    %c0_i32_0 = arith.constant 0 : i32
    %c0_i32_1 = arith.constant 0 : i32
    return %c0_i32, %c0_i32_0 : i32, i32
  }
  func.func @transform_3(%arg0: i32) -> (i32, i32) {
    %c0_i32 = arith.constant 0 : i32
    %c0_i32_0 = arith.constant 0 : i32
    %c0_i32_1 = arith.constant 0 : i32
    return %c0_i32, %c0_i32_0 : i32, i32
  }
  func.func @transform_4(%arg0: i32) -> (i32, i32) {
    %c0_i32 = arith.constant 0 : i32
    %c0_i32_0 = arith.constant 0 : i32
    %c0_i32_1 = arith.constant 0 : i32
    return %c0_i32, %c0_i32_0 : i32, i32
  }
  func.func @transform_5(%arg0: i32) -> (i32, i32) {
    %c0_i32 = arith.constant 0 : i32
    %c0_i32_0 = arith.constant 0 : i32
    %c0_i32_1 = arith.constant 0 : i32
    return %c0_i32, %c0_i32_0 : i32, i32
  }
  func.func @transform_6(%arg0: i32) -> (i32, i32) {
    %c0_i32 = arith.constant 0 : i32
    %c0_i32_0 = arith.constant 0 : i32
    return %c0_i32, %arg0 : i32, i32
  }
}

</mosaic_0001>

<llo_original>
// kernel: tpu_custom_call.1
$region0: #{tpu_custom_call.1}
  #allocation0 [shape = 'u32[]', space=smem, size = 0x4, offset = 0x4, fixed_abs, tag = 'smem constant byte address 0x4 - core index']
  #allocation1 [shape = 'u32[144,128]{1,0:T(1,128)}', space=vmem, size = 0x12000, scoped, tag = 'internal scratch']
  %s0 = inlined_call_operand.vmem [shape: f32[128,44], index: 0, kind: input, shape index: {}]
  %s1 = inlined_call_operand.vmem [shape: f32[1,128], index: 1, kind: input, shape index: {}]
  %s2 = inlined_call_operand.vmem [shape: f32[64,44], index: 2, kind: input, shape index: {}]
  %s3 = inlined_call_operand.vmem [shape: f32[64,64], index: 3, kind: input, shape index: {}]
  %s4 = inlined_call_operand.vmem [shape: f32[64,64], index: 4, kind: input, shape index: {}]
  %s5 = inlined_call_operand.vmem [shape: f32[64,6], index: 5, kind: input, shape index: {}]
  %s6 = inlined_call_operand.hbm [shape: f32[1,128], index: 6, kind: output, shape index: {}]
  %s7 = sld [smem:[#allocation0]]
  $region34: #{tpu_custom_call.1} parent=0
    _
  %s9 = ssub.s32 1, %s7
  %s10 = scalar_select 0, %s9, %s7
  $region1: #{tpu_custom_call.1} parent=0
    #allocation2 [shape = 'u8[512]{0}', space=vmem, size = 0x400, scoped, tag = 'output window, operand 0, single buffered']
    #allocation3 [shape = 's32[1]{0}', space=sflag, size = 0x4, scoped, tag = 'scoped memory for tpu_custom_call.1']
    %11 = vsyncpa [#allocation3], 0
    // Predicated region
    $region2: #{tpu_custom_call.1} parent=1 // pred_check
      _
    $region3: #{tpu_custom_call.1} parent=1 // pred_check_branch
      %13 = sbr.rel (0) target = $region5
    $region4: #{tpu_custom_call.1} parent=1 // pred_region
      _
    $region5: #{tpu_custom_call.1} parent=1 // pred_fallthru
      _
    // Predicated region
    $region6: #{tpu_custom_call.1} parent=1 // pred_check
      _
    $region7: #{tpu_custom_call.1} parent=1 // pred_check_branch
      %15 = sbr.rel (0) target = $region9
    $region8: #{tpu_custom_call.1} parent=1 // pred_region
      _
    $region9: #{tpu_custom_call.1} parent=1 // pred_fallthru
      _
    // Predicated region
    $region10: #{tpu_custom_call.1} parent=1 // pred_check
      _
    $region11: #{tpu_custom_call.1} parent=1 // pred_check_branch
      %17 = sbr.rel (0) target = $region13
    $region12: #{tpu_custom_call.1} parent=1 // pred_region
      _
    $region13: #{tpu_custom_call.1} parent=1 // pred_fallthru
      _
    // Predicated region
    $region14: #{tpu_custom_call.1} parent=1 // pred_check
      _
    $region15: #{tpu_custom_call.1} parent=1 // pred_check_branch
      %19 = sbr.rel (0) target = $region17
    $region16: #{tpu_custom_call.1} parent=1 // pred_region
      _
    $region17: #{tpu_custom_call.1} parent=1 // pred_fallthru
      _
    // Predicated region
    $region18: #{tpu_custom_call.1} parent=1 // pred_check
      _
    $region19: #{tpu_custom_call.1} parent=1 // pred_check_branch
      %21 = sbr.rel (0) target = $region21
    $region20: #{tpu_custom_call.1} parent=1 // pred_region
      _
    $region21: #{tpu_custom_call.1} parent=1 // pred_fallthru
      _
    // Predicated region
    $region22: #{tpu_custom_call.1} parent=1 // pred_check
      _
    $region23: #{tpu_custom_call.1} parent=1 // pred_check_branch
      %23 = sbr.rel (0) target = $region25
    $region24: #{tpu_custom_call.1} parent=1 // pred_region
      _
    $region25: #{tpu_custom_call.1} parent=1 // pred_fallthru
      _
    %v24 = vld [vmem:[%s0] sm:$0xff]
    %v25 = vld [vmem:[%s0 + $0x8] sm:$0xff]
    %v26 = vld [vmem:[%s0 + $0x10] sm:$0xff]
    %v27 = vld [vmem:[%s0 + $0x18] sm:$0xff]
    %v28 = vld [vmem:[%s0 + $0x20] sm:$0xff]
    %v29 = vld [vmem:[%s0 + $0x28] sm:$0xff]
    %v30 = vld [vmem:[%s0 + $0x30] sm:$0xff]
    %v31 = vld [vmem:[%s0 + $0x38] sm:$0xff]
    %v32 = vld [vmem:[%s0 + $0x40] sm:$0xff]
    %v33 = vld [vmem:[%s0 + $0x48] sm:$0xff]
    %v34 = vld [vmem:[%s0 + $0x50] sm:$0xff]
    %v35 = vld [vmem:[%s0 + $0x58] sm:$0xff]
    %v36 = vld [vmem:[%s0 + $0x60] sm:$0xff]
    %v37 = vld [vmem:[%s0 + $0x68] sm:$0xff]
    %v38 = vld [vmem:[%s0 + $0x70] sm:$0xff]
    %v39 = vld [vmem:[%s0 + $0x78] sm:$0xff]
    %v40 = vld [vmem:[%s1] sm:$0x1]
    %v41 = vld [vmem:[%s5] sm:$0xff]
    %v42 = vld [vmem:[%s5 + $0x8] sm:$0xff]
    %v43 = vld [vmem:[%s5 + $0x10] sm:$0xff]
    %v44 = vld [vmem:[%s5 + $0x18] sm:$0xff]
    %v45 = vld [vmem:[%s5 + $0x20] sm:$0xff]
    %v46 = vld [vmem:[%s5 + $0x28] sm:$0xff]
    %v47 = vld [vmem:[%s5 + $0x30] sm:$0xff]
    %v48 = vld [vmem:[%s5 + $0x38] sm:$0xff]
    %v49 = vld [vmem:[%s2] sm:$0xff]
    %v50 = vld [vmem:[%s2 + $0x8] sm:$0xff]
    %v51 = vld [vmem:[%s2 + $0x10] sm:$0xff]
    %v52 = vld [vmem:[%s2 + $0x18] sm:$0xff]
    %v53 = vld [vmem:[%s2 + $0x20] sm:$0xff]
    %v54 = vld [vmem:[%s2 + $0x28] sm:$0xff]
    %v55 = vld [vmem:[%s2 + $0x30] sm:$0xff]
    %v56 = vld [vmem:[%s2 + $0x38] sm:$0xff]
    %58 = vset.pattern.permute.xlu0 0
    %59 = vperm.xlu0 %58, %v41
    %v60 = vpop.permute.xlu0 %59
    %63 = vset.pattern.permute.xlu0 0
    %64 = vperm.xlu0 %63, %v42
    %v65 = vpop.permute.xlu0 %64
    %68 = vset.pattern.permute.xlu0 0
    %69 = vperm.xlu0 %68, %v43
    %v70 = vpop.permute.xlu0 %69
    %73 = vset.pattern.permute.xlu0 0
    %74 = vperm.xlu0 %73, %v44
    %v75 = vpop.permute.xlu0 %74
    %78 = vset.pattern.permute.xlu0 0
    %79 = vperm.xlu0 %78, %v45
    %v80 = vpop.permute.xlu0 %79
    %83 = vset.pattern.permute.xlu0 0
    %84 = vperm.xlu0 %83, %v46
    %v85 = vpop.permute.xlu0 %84
    %88 = vset.pattern.permute.xlu0 0
    %89 = vperm.xlu0 %88, %v47
    %v90 = vpop.permute.xlu0 %89
    %93 = vset.pattern.permute.xlu0 0
    %94 = vperm.xlu0 %93, %v48
    %v95 = vpop.permute.xlu0 %94
    %v98 = vlaneseq
    %v99 = vshrl.u32 %v98, 7
    %v100 = vsub.s32 0, %v99
    %v101 = vrot.slane %v40, %v100
    %v103 = vmul.f32 %v60, %v101
    %v104 = vmul.f32 %v65, %v101
    %v105 = vmul.f32 %v70, %v101
    %v106 = vmul.f32 %v75, %v101
    %v107 = vmul.f32 %v80, %v101
    %v108 = vmul.f32 %v85, %v101
    %v109 = vmul.f32 %v90, %v101
    %v110 = vmul.f32 %v95, %v101
    %vm111 = vcmask 359424
    %v113 = vsel %vm111, %v49, 0
    %v116 = vsel %vm111, %v50, 0
    %v119 = vsel %vm111, %v51, 0
    %v122 = vsel %vm111, %v52, 0
    %v125 = vsel %vm111, %v53, 0
    %v128 = vsel %vm111, %v54, 0
    %v131 = vsel %vm111, %v55, 0
    %v134 = vsel %vm111, %v56, 0
    %v137 = vsel %vm111, %v24, 0
    %v140 = vsel %vm111, %v25, 0
    %v143 = vsel %vm111, %v26, 0
    %v146 = vsel %vm111, %v27, 0
    %v149 = vsel %vm111, %v28, 0
    %v152 = vsel %vm111, %v29, 0
    %v155 = vsel %vm111, %v30, 0
    %v158 = vsel %vm111, %v31, 0
    %v161 = vsel %vm111, %v32, 0
    %v164 = vsel %vm111, %v33, 0
    %v167 = vsel %vm111, %v34, 0
    %v170 = vsel %vm111, %v35, 0
    %v173 = vsel %vm111, %v36, 0
    %v176 = vsel %vm111, %v37, 0
    %v179 = vsel %vm111, %v38, 0
    %v182 = vsel %vm111, %v39, 0
    %184 = vmatprep.subr.mxu0 0.0
    %185 = vmatpush1.xpose.msra.mxu0 %v182
    %186 = vmatprep.subr.mxu0 0.0
    %187 = vmatpush1.xpose.msra.mxu0 %v179
    %188 = vmatprep.subr.mxu0 0.0
    %189 = vmatpush1.xpose.msra.mxu0 %v176
    %190 = vmatprep.subr.mxu0 0.0
    %191 = vmatpush1.xpose.msra.mxu0 %v173
    %192 = vmatprep.subr.mxu0 0.0
    %193 = vmatpush1.xpose.msra.mxu0 %v170
    %194 = vmatprep.subr.mxu0 0.0
    %195 = vmatpush1.xpose.msra.mxu0 %v167
    %196 = vmatprep.subr.mxu0 0.0
    %197 = vmatpush1.xpose.msra.mxu0 %v164
    %198 = vmatprep.subr.mxu0 0.0
    %199 = vmatpush1.xpose.msra.mxu0 %v161
    %200 = vmatprep.subr.mxu0 0.0
    %201 = vmatpush1.xpose.msra.mxu0 %v158
    %202 = vmatprep.subr.mxu0 0.0
    %203 = vmatpush1.xpose.msra.mxu0 %v155
    %204 = vmatprep.subr.mxu0 0.0
    %205 = vmatpush1.xpose.msra.mxu0 %v152
    %206 = vmatprep.subr.mxu0 0.0
    %207 = vmatpush1.xpose.msra.mxu0 %v149
    %208 = vmatprep.subr.mxu0 0.0
    %209 = vmatpush1.xpose.msra.mxu0 %v146
    %210 = vmatprep.subr.mxu0 0.0
    %211 = vmatpush1.xpose.msra.mxu0 %v143
    %212 = vmatprep.subr.mxu0 0.0
    %213 = vmatpush1.xpose.msra.mxu0 %v140
    %214 = vmatprep.subr.mxu0 0.0
    %215 = vmatpush1.xpose.msra.mxu0 %v137
    %216 = vmatprep.subr.mxu0 0.0
    %217 = vmatpush2.xpose.msra.mxu0 0.0
    %218 = vmatprep.subr.mxu0 0.0
    %219 = vmatpush2.xpose.msra.mxu0 0.0
    %220 = vmatprep.subr.mxu0 0.0
    %221 = vmatpush2.xpose.msra.mxu0 0.0
    %222 = vmatprep.subr.mxu0 0.0
    %223 = vmatpush2.xpose.msra.mxu0 0.0
    %224 = vmatprep.subr.mxu0 0.0
    %225 = vmatpush2.xpose.msra.mxu0 0.0
    %226 = vmatprep.subr.mxu0 0.0
    %227 = vmatpush2.xpose.msra.mxu0 0.0
    %228 = vmatprep.subr.mxu0 0.0
    %229 = vmatpush2.xpose.msra.mxu0 0.0
    %230 = vmatprep.subr.mxu0 0.0
    %231 = vmatpush2.xpose.msra.mxu0 0.0
    %232 = vmatprep.subr.mxu0 0.0
    %233 = vmatpush2.xpose.msra.mxu0 0.0
    %234 = vmatprep.subr.mxu0 0.0
    %235 = vmatpush2.xpose.msra.mxu0 0.0
    %236 = vmatprep.subr.mxu0 0.0
    %237 = vmatpush2.xpose.msra.mxu0 0.0
    %238 = vmatprep.subr.mxu0 0.0
    %239 = vmatpush2.xpose.msra.mxu0 0.0
    %240 = vmatprep.subr.mxu0 0.0
    %241 = vmatpush2.xpose.msra.mxu0 0.0
    %242 = vmatprep.subr.mxu0 0.0
    %243 = vmatpush2.xpose.msra.mxu0 0.0
    %244 = vmatprep.subr.mxu0 0.0
    %245 = vmatpush2.xpose.msra.mxu0 0.0
    %246 = vmatprep.subr.mxu0 0.0
    %247 = vmatpush2.xpose.msra.mxu0 0.0
    %248 = vmatprep.mubr.f32.mxu0 0.0
    %249 = vmatmul.mubr.f32.gmra.mxu0 %v113
    %v250 = vpop.f32.mrf.mxu0
    %v251 = vadd.f32 %v103, %v250
    %v252 = vpop.f32.mrf.mxu0
    %253 = vmatprep.mubr.f32.mxu0 0.0
    %254 = vmatmul.mubr.f32.gmra.mxu0 %v116
    %v255 = vpop.f32.mrf.mxu0
    %v256 = vadd.f32 %v104, %v255
    %v257 = vpop.f32.mrf.mxu0
    %258 = vmatprep.mubr.f32.mxu0 0.0
    %259 = vmatmul.mubr.f32.gmra.mxu0 %v119
    %v260 = vpop.f32.mrf.mxu0
    %v261 = vadd.f32 %v105, %v260
    %v262 = vpop.f32.mrf.mxu0
    %263 = vmatprep.mubr.f32.mxu0 0.0
    %264 = vmatmul.mubr.f32.gmra.mxu0 %v122
    %v265 = vpop.f32.mrf.mxu0
    %v266 = vadd.f32 %v106, %v265
    %v267 = vpop.f32.mrf.mxu0
    %268 = vmatprep.mubr.f32.mxu0 0.0
    %269 = vmatmul.mubr.f32.gmra.mxu0 %v125
    %v270 = vpop.f32.mrf.mxu0
    %v271 = vadd.f32 %v107, %v270
    %v272 = vpop.f32.mrf.mxu0
    %273 = vmatprep.mubr.f32.mxu0 0.0
    %274 = vmatmul.mubr.f32.gmra.mxu0 %v128
    %v275 = vpop.f32.mrf.mxu0
    %v276 = vadd.f32 %v108, %v275
    %v277 = vpop.f32.mrf.mxu0
    %278 = vmatprep.mubr.f32.mxu0 0.0
    %279 = vmatmul.mubr.f32.gmra.mxu0 %v131
    %v280 = vpop.f32.mrf.mxu0
    %v281 = vadd.f32 %v109, %v280
    %v282 = vpop.f32.mrf.mxu0
    %283 = vmatprep.mubr.f32.mxu0 0.0
    %284 = vmatmul.mubr.f32.gmra.mxu0 %v134
    %v285 = vpop.f32.mrf.mxu0
    %v286 = vadd.f32 %v110, %v285
    %v287 = vpop.f32.mrf.mxu0
    %288 = vdwg.mxu0
    %289 = vset.pattern.permute.xlu0 1
    %290 = vperm.xlu0 %289, %v41
    %v291 = vpop.permute.xlu0 %290
    %293 = vset.pattern.permute.xlu0 1
    %294 = vperm.xlu0 %293, %v42
    %v295 = vpop.permute.xlu0 %294
    %297 = vset.pattern.permute.xlu0 1
    %298 = vperm.xlu0 %297, %v43
    %v299 = vpop.permute.xlu0 %298
    %301 = vset.pattern.permute.xlu0 1
    %302 = vperm.xlu0 %301, %v44
    %v303 = vpop.permute.xlu0 %302
    %305 = vset.pattern.permute.xlu0 1
    %306 = vperm.xlu0 %305, %v45
    %v307 = vpop.permute.xlu0 %306
    %309 = vset.pattern.permute.xlu0 1
    %310 = vperm.xlu0 %309, %v46
    %v311 = vpop.permute.xlu0 %310
    %313 = vset.pattern.permute.xlu0 1
    %314 = vperm.xlu0 %313, %v47
    %v315 = vpop.permute.xlu0 %314
    %317 = vset.pattern.permute.xlu0 1
    %318 = vperm.xlu0 %317, %v48
    %v319 = vpop.permute.xlu0 %318
    %v321 = vadd.f32 %v251, %v291
    %v322 = vadd.f32 %v256, %v295
    %v323 = vadd.f32 %v261, %v299
    %v324 = vadd.f32 %v266, %v303
    %v325 = vadd.f32 %v271, %v307
    %v326 = vadd.f32 %v276, %v311
    %v327 = vadd.f32 %v281, %v315
    %v328 = vadd.f32 %v286, %v319
    %v329 = vmax.f32 %v321, 0.0
    %v330 = vmax.f32 %v322, 0.0
    %v331 = vmax.f32 %v323, 0.0
    %v332 = vmax.f32 %v324, 0.0
    %v333 = vmax.f32 %v325, 0.0
    %v334 = vmax.f32 %v326, 0.0
    %v335 = vmax.f32 %v327, 0.0
    %v336 = vmax.f32 %v328, 0.0
    %v337 = vld [vmem:[%s3] sm:$0xff]
    %v338 = vld [vmem:[%s3 + $0x8] sm:$0xff]
    %v339 = vld [vmem:[%s3 + $0x10] sm:$0xff]
    %v340 = vld [vmem:[%s3 + $0x18] sm:$0xff]
    %v341 = vld [vmem:[%s3 + $0x20] sm:$0xff]
    %v342 = vld [vmem:[%s3 + $0x28] sm:$0xff]
    %v343 = vld [vmem:[%s3 + $0x30] sm:$0xff]
    %v344 = vld [vmem:[%s3 + $0x38] sm:$0xff]
    %345 = vset.pattern.permute.xlu0 2
    %346 = vperm.xlu0 %345, %v41
    %v347 = vpop.permute.xlu0 %346
    %349 = vset.pattern.permute.xlu0 2
    %350 = vperm.xlu0 %349, %v42
    %v351 = vpop.permute.xlu0 %350
    %353 = vset.pattern.permute.xlu0 2
    %354 = vperm.xlu0 %353, %v43
    %v355 = vpop.permute.xlu0 %354
    %357 = vset.pattern.permute.xlu0 2
    %358 = vperm.xlu0 %357, %v44
    %v359 = vpop.permute.xlu0 %358
    %361 = vset.pattern.permute.xlu0 2
    %362 = vperm.xlu0 %361, %v45
    %v363 = vpop.permute.xlu0 %362
    %365 = vset.pattern.permute.xlu0 2
    %366 = vperm.xlu0 %365, %v46
    %v367 = vpop.permute.xlu0 %366
    %369 = vset.pattern.permute.xlu0 2
    %370 = vperm.xlu0 %369, %v47
    %v371 = vpop.permute.xlu0 %370
    %373 = vset.pattern.permute.xlu0 2
    %374 = vperm.xlu0 %373, %v48
    %v375 = vpop.permute.xlu0 %374
    %vm377 = vcmask 523264
    %v379 = vsel %vm377, %v337, 0
    %v382 = vsel %vm377, %v338, 0
    %v385 = vsel %vm377, %v339, 0
    %v388 = vsel %vm377, %v340, 0
    %v391 = vsel %vm377, %v341, 0
    %v394 = vsel %vm377, %v342, 0
    %v397 = vsel %vm377, %v343, 0
    %v400 = vsel %vm377, %v344, 0
    %402 = vmatprep.subr.mxu0 0.0
    %403 = vmatpush1.msra.mxu0 0.0
    %404 = vmatprep.subr.mxu0 0.0
    %405 = vmatpush1.msra.mxu0 0.0
    %406 = vmatprep.subr.mxu0 0.0
    %407 = vmatpush1.msra.mxu0 0.0
    %408 = vmatprep.subr.mxu0 0.0
    %409 = vmatpush1.msra.mxu0 0.0
    %410 = vmatprep.subr.mxu0 0.0
    %411 = vmatpush1.msra.mxu0 0.0
    %412 = vmatprep.subr.mxu0 0.0
    %413 = vmatpush1.msra.mxu0 0.0
    %414 = vmatprep.subr.mxu0 0.0
    %415 = vmatpush1.msra.mxu0 0.0
    %416 = vmatprep.subr.mxu0 0.0
    %417 = vmatpush1.msra.mxu0 0.0
    %418 = vmatprep.subr.mxu0 0.0
    %419 = vmatpush1.msra.mxu0 %v336
    %420 = vmatprep.subr.mxu0 0.0
    %421 = vmatpush1.msra.mxu0 %v335
    %422 = vmatprep.subr.mxu0 0.0
    %423 = vmatpush1.msra.mxu0 %v334
    %424 = vmatprep.subr.mxu0 0.0
    %425 = vmatpush1.msra.mxu0 %v333
    %426 = vmatprep.subr.mxu0 0.0
    %427 = vmatpush1.msra.mxu0 %v332
    %428 = vmatprep.subr.mxu0 0.0
    %429 = vmatpush1.msra.mxu0 %v331
    %430 = vmatprep.subr.mxu0 0.0
    %431 = vmatpush1.msra.mxu0 %v330
    %432 = vmatprep.subr.mxu0 0.0
    %433 = vmatpush1.msra.mxu0 %v329
    %434 = vmatprep.subr.mxu0 0.0
    %435 = vmatpush2.msra.mxu0 0.0
    %436 = vmatprep.subr.mxu0 0.0
    %437 = vmatpush2.msra.mxu0 0.0
    %438 = vmatprep.subr.mxu0 0.0
    %439 = vmatpush2.msra.mxu0 0.0
    %440 = vmatprep.subr.mxu0 0.0
    %441 = vmatpush2.msra.mxu0 0.0
    %442 = vmatprep.subr.mxu0 0.0
    %443 = vmatpush2.msra.mxu0 0.0
    %444 = vmatprep.subr.mxu0 0.0
    %445 = vmatpush2.msra.mxu0 0.0
    %446 = vmatprep.subr.mxu0 0.0
    %447 = vmatpush2.msra.mxu0 0.0
    %448 = vmatprep.subr.mxu0 0.0
    %449 = vmatpush2.msra.mxu0 0.0
    %450 = vmatprep.subr.mxu0 0.0
    %451 = vmatpush2.msra.mxu0 0.0
    %452 = vmatprep.subr.mxu0 0.0
    %453 = vmatpush2.msra.mxu0 0.0
    %454 = vmatprep.subr.mxu0 0.0
    %455 = vmatpush2.msra.mxu0 0.0
    %456 = vmatprep.subr.mxu0 0.0
    %457 = vmatpush2.msra.mxu0 0.0
    %458 = vmatprep.subr.mxu0 0.0
    %459 = vmatpush2.msra.mxu0 0.0
    %460 = vmatprep.subr.mxu0 0.0
    %461 = vmatpush2.msra.mxu0 0.0
    %462 = vmatprep.subr.mxu0 0.0
    %463 = vmatpush2.msra.mxu0 0.0
    %464 = vmatprep.subr.mxu0 0.0
    %465 = vmatpush2.msra.mxu0 0.0
    %466 = vmatprep.mubr.f32.mxu0 0.0
    %467 = vmatmul.mubr.f32.gmra.mxu0 %v379
    %v468 = vpop.f32.mrf.mxu0
    %v469 = vadd.f32 %v347, %v468
    %v470 = vpop.f32.mrf.mxu0
    %471 = vmatprep.mubr.f32.mxu0 0.0
    %472 = vmatmul.mubr.f32.gmra.mxu0 %v382
    %v473 = vpop.f32.mrf.mxu0
    %v474 = vadd.f32 %v351, %v473
    %v475 = vpop.f32.mrf.mxu0
    %476 = vmatprep.mubr.f32.mxu0 0.0
    %477 = vmatmul.mubr.f32.gmra.mxu0 %v385
    %v478 = vpop.f32.mrf.mxu0
    %v479 = vadd.f32 %v355, %v478
    %v480 = vpop.f32.mrf.mxu0
    %481 = vmatprep.mubr.f32.mxu0 0.0
    %482 = vmatmul.mubr.f32.gmra.mxu0 %v388
    %v483 = vpop.f32.mrf.mxu0
    %v484 = vadd.f32 %v359, %v483
    %v485 = vpop.f32.mrf.mxu0
    %486 = vmatprep.mubr.f32.mxu0 0.0
    %487 = vmatmul.mubr.f32.gmra.mxu0 %v391
    %v488 = vpop.f32.mrf.mxu0
    %v489 = vadd.f32 %v363, %v488
    %v490 = vpop.f32.mrf.mxu0
    %491 = vmatprep.mubr.f32.mxu0 0.0
    %492 = vmatmul.mubr.f32.gmra.mxu0 %v394
    %v493 = vpop.f32.mrf.mxu0
    %v494 = vadd.f32 %v367, %v493
    %v495 = vpop.f32.mrf.mxu0
    %496 = vmatprep.mubr.f32.mxu0 0.0
    %497 = vmatmul.mubr.f32.gmra.mxu0 %v397
    %v498 = vpop.f32.mrf.mxu0
    %v499 = vadd.f32 %v371, %v498
    %v500 = vpop.f32.mrf.mxu0
    %501 = vmatprep.mubr.f32.mxu0 0.0
    %502 = vmatmul.mubr.f32.gmra.mxu0 %v400
    %v503 = vpop.f32.mrf.mxu0
    %v504 = vadd.f32 %v375, %v503
    %v505 = vpop.f32.mrf.mxu0
    %506 = vdwg.mxu0
    %v507 = vmax.f32 %v469, 0.0
    %v508 = vmax.f32 %v474, 0.0
    %v509 = vmax.f32 %v479, 0.0
    %v510 = vmax.f32 %v484, 0.0
    %v511 = vmax.f32 %v489, 0.0
    %v512 = vmax.f32 %v494, 0.0
    %v513 = vmax.f32 %v499, 0.0
    %v514 = vmax.f32 %v504, 0.0
    %v515 = vld [vmem:[%s4] sm:$0xff]
    %v516 = vld [vmem:[%s4 + $0x8] sm:$0xff]
    %v517 = vld [vmem:[%s4 + $0x10] sm:$0xff]
    %v518 = vld [vmem:[%s4 + $0x18] sm:$0xff]
    %v519 = vld [vmem:[%s4 + $0x20] sm:$0xff]
    %v520 = vld [vmem:[%s4 + $0x28] sm:$0xff]
    %v521 = vld [vmem:[%s4 + $0x30] sm:$0xff]
    %v522 = vld [vmem:[%s4 + $0x38] sm:$0xff]
    %523 = vset.pattern.permute.xlu0 3
    %524 = vperm.xlu0 %523, %v41
    %v525 = vpop.permute.xlu0 %524
    %527 = vset.pattern.permute.xlu0 3
    %528 = vperm.xlu0 %527, %v42
    %v529 = vpop.permute.xlu0 %528
    %531 = vset.pattern.permute.xlu0 3
    %532 = vperm.xlu0 %531, %v43
    %v533 = vpop.permute.xlu0 %532
    %535 = vset.pattern.permute.xlu0 3
    %536 = vperm.xlu0 %535, %v44
    %v537 = vpop.permute.xlu0 %536
    %539 = vset.pattern.permute.xlu0 3
    %540 = vperm.xlu0 %539, %v45
    %v541 = vpop.permute.xlu0 %540
    %543 = vset.pattern.permute.xlu0 3
    %544 = vperm.xlu0 %543, %v46
    %v545 = vpop.permute.xlu0 %544
    %547 = vset.pattern.permute.xlu0 3
    %548 = vperm.xlu0 %547, %v47
    %v549 = vpop.permute.xlu0 %548
    %551 = vset.pattern.permute.xlu0 3
    %552 = vperm.xlu0 %551, %v48
    %v553 = vpop.permute.xlu0 %552
    %v556 = vsel %vm377, %v515, 0
    %v559 = vsel %vm377, %v516, 0
    %v562 = vsel %vm377, %v517, 0
    %v565 = vsel %vm377, %v518, 0
    %v568 = vsel %vm377, %v519, 0
    %v571 = vsel %vm377, %v520, 0
    %v574 = vsel %vm377, %v521, 0
    %v577 = vsel %vm377, %v522, 0
    %579 = vmatprep.subr.mxu0 0.0
    %580 = vmatpush1.msra.mxu0 0.0
    %581 = vmatprep.subr.mxu0 0.0
    %582 = vmatpush1.msra.mxu0 0.0
    %583 = vmatprep.subr.mxu0 0.0
    %584 = vmatpush1.msra.mxu0 0.0
    %585 = vmatprep.subr.mxu0 0.0
    %586 = vmatpush1.msra.mxu0 0.0
    %587 = vmatprep.subr.mxu0 0.0
    %588 = vmatpush1.msra.mxu0 0.0
    %589 = vmatprep.subr.mxu0 0.0
    %590 = vmatpush1.msra.mxu0 0.0
    %591 = vmatprep.subr.mxu0 0.0
    %592 = vmatpush1.msra.mxu0 0.0
    %593 = vmatprep.subr.mxu0 0.0
    %594 = vmatpush1.msra.mxu0 0.0
    %595 = vmatprep.subr.mxu0 0.0
    %596 = vmatpush1.msra.mxu0 %v514
    %597 = vmatprep.subr.mxu0 0.0
    %598 = vmatpush1.msra.mxu0 %v513
    %599 = vmatprep.subr.mxu0 0.0
    %600 = vmatpush1.msra.mxu0 %v512
    %601 = vmatprep.subr.mxu0 0.0
    %602 = vmatpush1.msra.mxu0 %v511
    %603 = vmatprep.subr.mxu0 0.0
    %604 = vmatpush1.msra.mxu0 %v510
    %605 = vmatprep.subr.mxu0 0.0
    %606 = vmatpush1.msra.mxu0 %v509
    %607 = vmatprep.subr.mxu0 0.0
    %608 = vmatpush1.msra.mxu0 %v508
    %609 = vmatprep.subr.mxu0 0.0
    %610 = vmatpush1.msra.mxu0 %v507
    %611 = vmatprep.subr.mxu0 0.0
    %612 = vmatpush2.msra.mxu0 0.0
    %613 = vmatprep.subr.mxu0 0.0
    %614 = vmatpush2.msra.mxu0 0.0
    %615 = vmatprep.subr.mxu0 0.0
    %616 = vmatpush2.msra.mxu0 0.0
    %617 = vmatprep.subr.mxu0 0.0
    %618 = vmatpush2.msra.mxu0 0.0
    %619 = vmatprep.subr.mxu0 0.0
    %620 = vmatpush2.msra.mxu0 0.0
    %621 = vmatprep.subr.mxu0 0.0
    %622 = vmatpush2.msra.mxu0 0.0
    %623 = vmatprep.subr.mxu0 0.0
    %624 = vmatpush2.msra.mxu0 0.0
    %625 = vmatprep.subr.mxu0 0.0
    %626 = vmatpush2.msra.mxu0 0.0
    %627 = vmatprep.subr.mxu0 0.0
    %628 = vmatpush2.msra.mxu0 0.0
    %629 = vmatprep.subr.mxu0 0.0
    %630 = vmatpush2.msra.mxu0 0.0
    %631 = vmatprep.subr.mxu0 0.0
    %632 = vmatpush2.msra.mxu0 0.0
    %633 = vmatprep.subr.mxu0 0.0
    %634 = vmatpush2.msra.mxu0 0.0
    %635 = vmatprep.subr.mxu0 0.0
    %636 = vmatpush2.msra.mxu0 0.0
    %637 = vmatprep.subr.mxu0 0.0
    %638 = vmatpush2.msra.mxu0 0.0
    %639 = vmatprep.subr.mxu0 0.0
    %640 = vmatpush2.msra.mxu0 0.0
    %641 = vmatprep.subr.mxu0 0.0
    %642 = vmatpush2.msra.mxu0 0.0
    %643 = vmatprep.mubr.f32.mxu0 0.0
    %644 = vmatmul.mubr.f32.gmra.mxu0 %v556
    %v645 = vpop.f32.mrf.mxu0
    %v646 = vadd.f32 %v525, %v645
    %v647 = vpop.f32.mrf.mxu0
    %648 = vmatprep.mubr.f32.mxu0 0.0
    %649 = vmatmul.mubr.f32.gmra.mxu0 %v559
    %v650 = vpop.f32.mrf.mxu0
    %v651 = vadd.f32 %v529, %v650
    %v652 = vpop.f32.mrf.mxu0
    %653 = vmatprep.mubr.f32.mxu0 0.0
    %654 = vmatmul.mubr.f32.gmra.mxu0 %v562
    %v655 = vpop.f32.mrf.mxu0
    %v656 = vadd.f32 %v533, %v655
    %v657 = vpop.f32.mrf.mxu0
    %658 = vmatprep.mubr.f32.mxu0 0.0
    %659 = vmatmul.mubr.f32.gmra.mxu0 %v565
    %v660 = vpop.f32.mrf.mxu0
    %v661 = vadd.f32 %v537, %v660
    %v662 = vpop.f32.mrf.mxu0
    %663 = vmatprep.mubr.f32.mxu0 0.0
    %664 = vmatmul.mubr.f32.gmra.mxu0 %v568
    %v665 = vpop.f32.mrf.mxu0
    %v666 = vadd.f32 %v541, %v665
    %v667 = vpop.f32.mrf.mxu0
    %668 = vmatprep.mubr.f32.mxu0 0.0
    %669 = vmatmul.mubr.f32.gmra.mxu0 %v571
    %v670 = vpop.f32.mrf.mxu0
    %v671 = vadd.f32 %v545, %v670
    %v672 = vpop.f32.mrf.mxu0
    %673 = vmatprep.mubr.f32.mxu0 0.0
    %674 = vmatmul.mubr.f32.gmra.mxu0 %v574
    %v675 = vpop.f32.mrf.mxu0
    %v676 = vadd.f32 %v549, %v675
    %v677 = vpop.f32.mrf.mxu0
    %678 = vmatprep.mubr.f32.mxu0 0.0
    %679 = vmatmul.mubr.f32.gmra.mxu0 %v577
    %v680 = vpop.f32.mrf.mxu0
    %v681 = vadd.f32 %v553, %v680
    %v682 = vpop.f32.mrf.mxu0
    %683 = vdwg.mxu0
    %v684 = vmax.f32 %v646, 0.0
    %v685 = vmax.f32 %v651, 0.0
    %v686 = vmax.f32 %v656, 0.0
    %v687 = vmax.f32 %v661, 0.0
    %v688 = vmax.f32 %v666, 0.0
    %v689 = vmax.f32 %v671, 0.0
    %v690 = vmax.f32 %v676, 0.0
    %v691 = vmax.f32 %v681, 0.0
    %692 = vset.pattern.permute.xlu0 4
    %693 = vperm.xlu0 %692, %v41
    %v694 = vpop.permute.xlu0 %693
    %696 = vset.pattern.permute.xlu0 4
    %697 = vperm.xlu0 %696, %v42
    %v698 = vpop.permute.xlu0 %697
    %700 = vset.pattern.permute.xlu0 4
    %701 = vperm.xlu0 %700, %v43
    %v702 = vpop.permute.xlu0 %701
    %704 = vset.pattern.permute.xlu0 4
    %705 = vperm.xlu0 %704, %v44
    %v706 = vpop.permute.xlu0 %705
    %708 = vset.pattern.permute.xlu0 4
    %709 = vperm.xlu0 %708, %v45
    %v710 = vpop.permute.xlu0 %709
    %712 = vset.pattern.permute.xlu0 4
    %713 = vperm.xlu0 %712, %v46
    %v714 = vpop.permute.xlu0 %713
    %716 = vset.pattern.permute.xlu0 4
    %717 = vperm.xlu0 %716, %v47
    %v718 = vpop.permute.xlu0 %717
    %720 = vset.pattern.permute.xlu0 4
    %721 = vperm.xlu0 %720, %v48
    %v722 = vpop.permute.xlu0 %721
    %v724 = vmul.f32 %v684, %v694
    %v725 = vmul.f32 %v685, %v698
    %v726 = vmul.f32 %v686, %v702
    %v727 = vmul.f32 %v687, %v706
    %v728 = vmul.f32 %v688, %v710
    %v729 = vmul.f32 %v689, %v714
    %v730 = vmul.f32 %v690, %v718
    %v731 = vmul.f32 %v691, %v722
    %v732 = vadd.f32 %v724, %v725
    %v733 = vadd.f32 %v732, %v726
    %v734 = vadd.f32 %v733, %v727
    %v735 = vadd.f32 %v734, %v728
    %v736 = vadd.f32 %v735, %v729
    %v737 = vadd.f32 %v736, %v730
    %v738 = vadd.f32 %v737, %v731
    %v739 = vrot.slane %v738, 4
    %v740 = vadd.f32 %v738, %v739
    %v741 = vrot.slane %v740, 2
    %v742 = vadd.f32 %v740, %v741
    %v743 = vrot.slane %v742, 1
    %v744 = vadd.f32 %v742, %v743
    %745 = vset.pattern.permute.xlu0 5
    %746 = vperm.xlu0 %745, %v41
    %v747 = vpop.permute.xlu0 %746
    %v749 = vadd.f32 %v744, %v747
    %750 = vst [vmem:[#allocation2] sm:$0x1] %v749
    // Predicated region
    $region26: #{tpu_custom_call.1} parent=1 // pred_check
      _
    $region27: #{tpu_custom_call.1} parent=1 // pred_check_branch
      %752 = sbr.rel (0) target = $region29
    $region28: #{tpu_custom_call.1} parent=1 // pred_region
      %s754 = ssub.s32 16, 16
      %755 = vsyncadd [#allocation3], %s754
      %s757 = sshll.u32 [#allocation2], 4
      %s758 = int_to_ptr.vmem [resolvable:$true] %s757
      %760 = dma.vmem_to_hbm [thread:$0]  %s758, 16, %s6, [#allocation3]
    $region29: #{tpu_custom_call.1} parent=1 // pred_fallthru
      _
    // Predicated region
    $region30: #{tpu_custom_call.1} parent=1 // pred_check
      _
    $region31: #{tpu_custom_call.1} parent=1 // pred_check_branch
      %762 = sbr.rel (0) target = $region33
    $region32: #{tpu_custom_call.1} parent=1 // pred_region
      %763 = dma.done [#allocation3], 16
    $region33: #{tpu_custom_call.1} parent=1 // pred_fallthru
      _
    %764 = vsyncpa [#allocation3], 1

</llo_original>
